<compile_context>
chip_gen: v7x
topology: tpu7x:2x2x1
jax: 0.10.0
libtpu: 0.0.40
codegen_flags: <defaults>
</compile_context>

<pallas_src>
import functools

import jax
import jax.numpy as jnp
from jax.experimental import pallas as pl
from jax.experimental.pallas import tpu as pltpu

_EPS = 1e-5
_SUBLANE_F32 = 8   # f32 sublane quantum: pad channels to a multiple of 8


def _probe_roll_like_jnp():
    """True  <=>  pltpu.roll(x, s, axis) matches jnp.roll(x, s, axis)."""
    def kern(x_ref, o_ref):
        o_ref[...] = pltpu.roll(x_ref[...], 1, axis=1)

    x = jnp.tile(jnp.arange(128, dtype=jnp.float32)[None, :], (8, 1))
    out = pl.pallas_call(
        kern,
        out_shape=jax.ShapeDtypeStruct((8, 128), jnp.float32),
        in_specs=[pl.BlockSpec(memory_space=pltpu.MemorySpace.VMEM)],
        out_specs=pl.BlockSpec(memory_space=pltpu.MemorySpace.VMEM),
    )(x)
    # jnp.roll semantics: out[i] = in[i - shift]  =>  out[0, 0] == 127
    return bool(out[0, 0] == 127.0)


# One-time probe at import (off the first-call hot path): pins the rotate-sign
# convention so the tap shifts never depend on it.
_ROLL_LIKE_JNP = _probe_roll_like_jnp()


def _make_resblock_kernel(C_pad, H, W, NHW, roll_like_jnp):
    taps = [(kh * 3 + kw, kh - 1, kw - 1) for kh in range(3) for kw in range(3)]

    def kernel(x_ref, w1_ref, g1_ref, be1_ref, w2_ref, g2_ref, be2_ref, out_ref):
        x = x_ref[...]                                     # (Cp, NHW) f32, lane-dense

        # Halo-validity coordinates built in-kernel (no (9, NHW) HBM mask stream).
        pos = jax.lax.broadcasted_iota(jnp.int32, (C_pad, NHW), 1)
        xc = pos % W                                       # fast spatial coord
        yc = (pos // W) % H                                # slow spatial coord
        inv_n = 1.0 / NHW

        def conv_bn(a, w_ref, g_ref, be_ref):
            # 3x3 conv as 9 per-tap accumulating MXU matmuls (no im2col scratch).
            acc = jnp.zeros((C_pad, NHW), jnp.float32)
            for k, dy, dx in taps:
                s = dy * W + dx
                if s == 0:
                    tap = a
                else:
                    amt = (-s) % NHW if roll_like_jnp else s % NHW
                    shifted = pltpu.roll(a, amt, axis=1)   # XLU rotate
                    valid = ((yc + dy >= 0) & (yc + dy < H) &
                             (xc + dx >= 0) & (xc + dx < W))
                    tap = jnp.where(valid, shifted, 0.0)   # zero the halo
                # bf16 operands + f32 accumulation: single MXU pass per tap.
                acc = acc + jnp.dot(w_ref[k], tap.astype(jnp.bfloat16),
                                    preferred_element_type=jnp.float32)
            # Train-mode BatchNorm2d, fused single-pass stats over (Cp, NHW).
            mean = jnp.sum(acc, axis=-1, keepdims=True) * inv_n
            ex2 = jnp.sum(acc * acc, axis=-1, keepdims=True) * inv_n
            var = ex2 - mean * mean
            inv = jax.lax.rsqrt(var + _EPS)                # EUP rsqrt
            return (acc - mean) * (inv * g_ref[...]) + be_ref[...]

        h = jnp.maximum(conv_bn(x, w1_ref, g1_ref, be1_ref), 0.0)
        y = conv_bn(h, w2_ref, g2_ref, be2_ref)
        out_ref[...] = jnp.maximum(y + x, 0.0)             # residual + ReLU, unmasked vst

    return kernel


@functools.partial(jax.jit, static_argnames=("roll_like_jnp",))
def _residual_block_impl(x, params, *, roll_like_jnp):
    N, C, H, W = x.shape
    NHW = N * H * W
    Cp = -(-C // _SUBLANE_F32) * _SUBLANE_F32

    # Layout glue (wrapper side): NCHW -> lane-dense (Cp, N*H*W), channels padded
    # to the sublane quantum.
    # TODO(synk): at ResNet-scale N/H/W fold this relayout into the kernel via a
    # batch/NHW grid axis instead of two extra wrapper-side HBM passes.
    x2 = jnp.transpose(x, (1, 0, 2, 3)).reshape(C, NHW)
    xp = jnp.pad(x2, ((0, Cp - C), (0, 0)))

    def pack_w(w):
        # (C_out, C_in, 3, 3) -> (9, Cp, Cp) bf16, tap-major: w_packed[k] is the
        # (co, ci) matrix for tap k = kh*3 + kw.
        wt = jnp.transpose(w, (2, 3, 0, 1)).reshape(9, C, C)
        wp = jnp.zeros((9, Cp, Cp), jnp.float32).at[:, :C, :C].set(wt)
        return wp.astype(jnp.bfloat16)

    def pack_cvec(v):
        return jnp.pad(v.reshape(C, 1), ((0, Cp - C), (0, 0)))

    # conv biases b1/b2 intentionally not passed: cancelled exactly by the
    # train-mode BN batch-mean subtraction (eval-mode BN would need them).
    vmem = pl.BlockSpec(memory_space=pltpu.MemorySpace.VMEM)
    out2 = pl.pallas_call(
        _make_resblock_kernel(Cp, H, W, NHW, roll_like_jnp),
        out_shape=jax.ShapeDtypeStruct((Cp, NHW), jnp.float32),
        in_specs=[vmem] * 7,
        out_specs=vmem,
    )(xp,
      pack_w(params["w1"]), pack_cvec(params["g1"]), pack_cvec(params["be1"]),
      pack_w(params["w2"]), pack_cvec(params["g2"]), pack_cvec(params["be2"]))

    return jnp.transpose(out2[:C].reshape(C, N, H, W), (1, 0, 2, 3))


def residual_block_pallas(x, params):
    return _residual_block_impl(x, params, roll_like_jnp=_ROLL_LIKE_JNP)


def residual_block_reference(x, p, *, mxu_bf16=False):
    """Pure-JAX reference mirroring the PyTorch forward (train-mode BN).

    mxu_bf16=True mimics the kernel's bf16 MXU operands (f32 accumulation) so a
    tight element-wise comparison is possible; mxu_bf16=False is the exact-f32
    PyTorch-equivalent forward.
    """
    dn = ("NCHW", "OIHW", "NCHW")
    if mxu_bf16:
        cast, prec = (lambda a: a.astype(jnp.bfloat16)), None
    else:
        cast, prec = (lambda a: a), jax.lax.Precision.HIGHEST

    def conv(z, w, b):
        y = jax.lax.conv_general_dilated(cast(z), cast(w), (1, 1),
                                         [(1, 1), (1, 1)],
                                         dimension_numbers=dn,
                                         precision=prec,
                                         preferred_element_type=jnp.float32)
        return y + b[None, :, None, None]

    def bn(y, g, be):
        mean = jnp.mean(y, axis=(0, 2, 3), keepdims=True)
        var = jnp.mean((y - mean) ** 2, axis=(0, 2, 3), keepdims=True)
        return ((y - mean) * jax.lax.rsqrt(var + _EPS)
                * g[None, :, None, None] + be[None, :, None, None])

    h = jax.nn.relu(bn(conv(x, p["w1"], p["b1"]), p["g1"], p["be1"]))
    y = bn(conv(h, p["w2"], p["b2"]), p["g2"], p["be2"])
    return jax.nn.relu(y + x)


def make_params(key, channels):
    ks = jax.random.split(key, 8)
    C = channels
    return {
        "w1": 0.1 * jax.random.normal(ks[0], (C, C, 3, 3), jnp.float32),
        "b1": 0.05 * jax.random.normal(ks[1], (C,), jnp.float32),
        "g1": 1.0 + 0.1 * jax.random.normal(ks[2], (C,), jnp.float32),
        "be1": 0.1 * jax.random.normal(ks[3], (C,), jnp.float32),
        "w2": 0.1 * jax.random.normal(ks[4], (C, C, 3, 3), jnp.float32),
        "b2": 0.05 * jax.random.normal(ks[5], (C,), jnp.float32),
        "g2": 1.0 + 0.1 * jax.random.normal(ks[6], (C,), jnp.float32),
        "be2": 0.1 * jax.random.normal(ks[7], (C,), jnp.float32),
    }


if __name__ == "__main__":
    N, C, H, W = 2, 4, 16, 16
    key = jax.random.PRNGKey(0)
    kx, kp = jax.random.split(key)
    x = jax.random.normal(kx, (N, C, H, W), jnp.float32)
    params = make_params(kp, C)

    out = residual_block_pallas(x, params)
    out = jax.block_until_ready(out)
    assert out.shape == (N, C, H, W)

    # Tight structural check against a reference using the same bf16 MXU
    # operands / f32 accumulation as the kernel.
    ref_bf16 = residual_block_reference(x, params, mxu_bf16=True)
    assert jnp.allclose(out, ref_bf16, atol=5e-3, rtol=5e-3), (
        float(jnp.max(jnp.abs(out - ref_bf16))))

    # Looser numeric check against the exact-f32 PyTorch-equivalent forward
    # (bf16 MXU operands trade a few 1e-3 of absolute error for 3-6x fewer
    # MXU passes; tolerance relaxed accordingly).
    ref_f32 = residual_block_reference(x, params, mxu_bf16=False)
    assert jnp.allclose(out, ref_f32, atol=5e-2, rtol=5e-2), (
        float(jnp.max(jnp.abs(out - ref_f32))))

    print("KERNEL_OK")
</pallas_src>

<mosaic_0001>
module attributes {stable_mosaic.version = 11 : i64} {
  func.func @kern(%arg0: memref<8x128xf32, #tpu.memory_space<vmem>>, %arg1: memref<8x128xf32, #tpu.memory_space<vmem>>) attributes {dimension_semantics = [], scalar_prefetch = 0 : i64, scratch_operands = 0 : i64, tpu.core_type = #tpu.core_type<tc>} {
    %c0 = arith.constant 0 : index
    %c0_0 = arith.constant 0 : index
    %0 = vector.load %arg0[%c0, %c0_0] : memref<8x128xf32, #tpu.memory_space<vmem>>, vector<8x128xf32>
    %c1_i32 = arith.constant 1 : i32
    %1 = tpu.dynamic_rotate %0 by %c1_i32 dim 1 : vector<8x128xf32>, i32 -> vector<8x128xf32>
    %c0_1 = arith.constant 0 : index
    %c0_2 = arith.constant 0 : index
    %2 = vector.load %arg1[%c0_1, %c0_2] : memref<8x128xf32, #tpu.memory_space<vmem>>, vector<8x128xf32>
    tpu.vector_store %arg1[%c0_1, %c0_2], %1 {strides = array<i32>} : memref<8x128xf32, #tpu.memory_space<vmem>>, vector<8x128xf32>,
    return
  }
}

</mosaic_0001>

<llo_original>
// kernel: tpu_custom_call.1
$region0: #{tpu_custom_call.1}
  #allocation0 [shape = 'u32[]', space=smem, size = 0x4, offset = 0x4, fixed_abs, tag = 'smem constant byte address 0x4 - core index']
  #allocation1 [shape = 'u32[144,128]{1,0:T(1,128)}', space=vmem, size = 0x12000, scoped, tag = 'internal scratch']
  %s0 = inlined_call_operand.hbm [shape: f32[8,128], index: 0, kind: input, shape index: {}]
  %s1 = inlined_call_operand.hbm [shape: f32[8,128], index: 1, kind: output, shape index: {}]
  %s2 = sld [smem:[#allocation0]]
  $region18: #{tpu_custom_call.1} parent=0
    _
  %s4 = ssub.s32 1, %s2
  %s5 = scalar_select 0, %s4, %s2
  $region1: #{tpu_custom_call.1} parent=0
    #allocation2 [shape = 'u8[4096]{0}', space=vmem, size = 0x1000, scoped, tag = 'input window, operand 0, single buffered']
    #allocation3 [shape = 's32[1]{0}', space=sflag, size = 0x4, scoped, tag = 'scoped memory for tpu_custom_call.1']
    #allocation4 [shape = 's32[1]{0}', space=sflag, size = 0x4, scoped, tag = 'scoped memory for tpu_custom_call.1']
    #allocation5 [shape = 'u8[4096]{0}', space=vmem, size = 0x1000, scoped, tag = 'output window, operand 0, single buffered']
    %6 = vsyncpa [#allocation3], 0
    %7 = vsyncpa [#allocation4], 0
    // Predicated region
    $region2: #{tpu_custom_call.1} parent=1 // pred_check
      _
    $region3: #{tpu_custom_call.1} parent=1 // pred_check_branch
      %9 = sbr.rel (0) target = $region5
    $region4: #{tpu_custom_call.1} parent=1 // pred_region
      %s11 = ssub.s32 128, 128
      %12 = vsyncadd [#allocation3], %s11
      %s14 = sshll.u32 [#allocation2], 4
      %s15 = int_to_ptr.vmem [resolvable:$true] %s14
      %17 = dma.hbm_to_vmem [thread:$0]  %s0, 128, %s15, [#allocation3]
    $region5: #{tpu_custom_call.1} parent=1 // pred_fallthru
      _
    // Predicated region
    $region6: #{tpu_custom_call.1} parent=1 // pred_check
      _
    $region7: #{tpu_custom_call.1} parent=1 // pred_check_branch
      %19 = sbr.rel (0) target = $region9
    $region8: #{tpu_custom_call.1} parent=1 // pred_region
      %20 = dma.done [#allocation3], 128
    $region9: #{tpu_custom_call.1} parent=1 // pred_fallthru
      _
    %v21 = vld [vmem:[#allocation2] sm:$0xff]
    %22 = vrot.lane.b32.xlu0 %v21, 1
    %v23 = vpop.permute.xlu0 %22
    %24 = vst [vmem:[#allocation5] sm:$0xff] %v23
    // Predicated region
    $region10: #{tpu_custom_call.1} parent=1 // pred_check
      _
    $region11: #{tpu_custom_call.1} parent=1 // pred_check_branch
      %26 = sbr.rel (0) target = $region13
    $region12: #{tpu_custom_call.1} parent=1 // pred_region
      %s28 = ssub.s32 128, 128
      %29 = vsyncadd [#allocation4], %s28
      %s31 = sshll.u32 [#allocation5], 4
      %s32 = int_to_ptr.vmem [resolvable:$true] %s31
      %34 = dma.vmem_to_hbm [thread:$0]  %s32, 128, %s1, [#allocation4]
    $region13: #{tpu_custom_call.1} parent=1 // pred_fallthru
      _
    // Predicated region
    $region14: #{tpu_custom_call.1} parent=1 // pred_check
      _
    $region15: #{tpu_custom_call.1} parent=1 // pred_check_branch
      %36 = sbr.rel (0) target = $region17
    $region16: #{tpu_custom_call.1} parent=1 // pred_region
      %37 = dma.done [#allocation4], 128
    $region17: #{tpu_custom_call.1} parent=1 // pred_fallthru
      _
    %38 = vsyncpa [#allocation3], 1
    %39 = vsyncpa [#allocation4], 1

</llo_original>
